<compile_context>
chip_gen: v7x
topology: tpu7x:2x2x1
jax: 0.10.0
libtpu: 0.0.40
codegen_flags: <defaults>
</compile_context>

<pallas_src>
import functools

import jax
import jax.numpy as jnp
from jax.experimental import pallas as pl
from jax.experimental.pallas import tpu as pltpu


_LANE = 128
_NEG_INF = -1e30


def _round_up(n, m):
    return ((n + m - 1) // m) * m


# ---------------------------------------------------------------------------
# Activations (mirrors activation_helper in the PyTorch module), f32 math.
# `valid_dim` masks zero-padded lanes for softmax (other activations are safe
# with padding because the next layer's padded weight rows are zero and the
# final padded output columns are sliced off).
# ---------------------------------------------------------------------------
def _apply_activation(name, x, valid_dim=None):
    if name is None:
        return x
    if name == "sigmoid":
        return jax.nn.sigmoid(x)
    if name == "tanh":
        return jnp.tanh(x)
    if name == "relu":
        return jnp.maximum(x, 0.0)
    if name == "softplus":
        return jax.nn.softplus(x)
    if name == "elu":
        return jax.nn.elu(x)
    if name == "softmax":
        d = x.shape[-1]
        if valid_dim is not None and valid_dim < d:
            col = jax.lax.broadcasted_iota(jnp.int32, x.shape, x.ndim - 1)
            x = jnp.where(col < valid_dim, x, _NEG_INF)
        return jax.nn.softmax(x, axis=-1)
    raise ValueError("unsupported activation: {}".format(name))


# ---------------------------------------------------------------------------
# Fused MLP kernel: all layers computed on one (TILE_B, *) batch tile in VMEM
# ---------------------------------------------------------------------------
def _make_mlp_kernel(n_layers, activation, output_activation, valid_out_dims):
    def kernel(*refs):
        # refs = (x_ref, w0, b0, w1, b1, ..., o_ref)
        x_ref = refs[0]
        param_refs = refs[1:1 + 2 * n_layers]
        o_ref = refs[1 + 2 * n_layers]

        h = x_ref[...].astype(jnp.float32)          # working precision f32
        for i in range(n_layers):                   # static unroll
            if i > 0:
                h = _apply_activation(activation, h, valid_out_dims[i - 1])
            w = param_refs[2 * i][...]                          # bf16 [din_p, dout_p]
            b = param_refs[2 * i + 1][...].astype(jnp.float32)  # f32  [1, dout_p]
            h = jnp.dot(h.astype(jnp.bfloat16), w,
                        preferred_element_type=jnp.float32) + b
        h = _apply_activation(output_activation, h, valid_out_dims[-1])
        o_ref[...] = h.astype(o_ref.dtype)

    return kernel


def mlp_forward(x, params, activation="relu", output_activation=None,
                tile_b=None):
    """x: [B, input_size]; params: list of (W [d_in, d_out], b [1, d_out])."""
    n_layers = len(params)
    B, d_in = x.shape
    dims = [d_in] + [w.shape[1] for (w, _) in params]
    valid_out_dims = tuple(dims[1:])
    dims_p = [max(_LANE, _round_up(d, _LANE)) for d in dims]

    # Pad feature dims to lane width; weights -> bf16 (MXU), bias stays f32.
    flat_params = []
    for li, (w, b) in enumerate(params):
        din_p, dout_p = dims_p[li], dims_p[li + 1]
        w_p = jnp.pad(w, ((0, din_p - w.shape[0]), (0, dout_p - w.shape[1])))
        b2 = b.reshape(1, -1)
        b_p = jnp.pad(b2, ((0, 0), (0, dout_p - b2.shape[1])))
        flat_params.append(w_p.astype(jnp.bfloat16))
        flat_params.append(b_p.astype(jnp.float32))

    # Batch tile: multiple of 8 sublanes, up to 256 rows (fills MXU M and stays
    # well inside v7x's 64 MiB VMEM with double-buffered activation tiles).
    if tile_b is None:
        tile_b = min(256, _round_up(B, 8))
    B_pad = _round_up(B, tile_b)
    x_p = jnp.pad(x, ((0, B_pad - B), (0, dims_p[0] - d_in))).astype(jnp.bfloat16)

    grid = (B_pad // tile_b,)
    in_specs = [pl.BlockSpec((tile_b, dims_p[0]), lambda i: (i, 0))]
    for li in range(n_layers):
        din_p, dout_p = dims_p[li], dims_p[li + 1]
        in_specs.append(pl.BlockSpec((din_p, dout_p), lambda i: (0, 0)))  # resident W
        in_specs.append(pl.BlockSpec((1, dout_p), lambda i: (0, 0)))      # resident b
    out_specs = pl.BlockSpec((tile_b, dims_p[-1]), lambda i: (i, 0))

    kernel = _make_mlp_kernel(n_layers, activation, output_activation,
                              valid_out_dims)

    # VMEM budget: resident params + double-buffered x/out tiles + f32 h.
    w_bytes = sum(int(p.size) * p.dtype.itemsize for p in flat_params)
    io_bytes = 2 * tile_b * dims_p[0] * 2 + 2 * tile_b * dims_p[-1] * 4
    h_bytes = 4 * tile_b * max(dims_p)
    vmem_limit = int(min(100 * 1024 * 1024,
                         max(32 * 1024 * 1024,
                             2 * (w_bytes + io_bytes + 4 * h_bytes))))

    out_p = pl.pallas_call(
        kernel,
        out_shape=jax.ShapeDtypeStruct((B_pad, dims_p[-1]), jnp.float32),
        grid=grid,
        in_specs=in_specs,
        out_specs=out_specs,
        compiler_params=pltpu.CompilerParams(
            dimension_semantics=("parallel",),
            vmem_limit_bytes=vmem_limit,
        ),
    )(x_p, *flat_params)

    return out_p[:B, :dims[-1]]


# ---------------------------------------------------------------------------
# Deterministic parameter init (PyTorch-Linear-like uniform(-1/sqrt(fan_in)))
# ---------------------------------------------------------------------------
def init_mlp_params(key, input_size, hidden, output_size):
    dims = [input_size] + list(hidden) + [output_size]
    params = []
    for d_in, d_out in zip(dims[:-1], dims[1:]):
        key, kw, kb = jax.random.split(key, 3)
        bound = 1.0 / (d_in ** 0.5)
        w = jax.random.uniform(kw, (d_in, d_out), jnp.float32, -bound, bound)
        b = jax.random.uniform(kb, (1, d_out), jnp.float32, -bound, bound)
        params.append((w, b))
    return params


# Pure-JAX reference with matching precision (bf16 dot inputs, f32 accumulate)
def mlp_reference(x, params, activation="relu", output_activation=None):
    h = x.astype(jnp.bfloat16).astype(jnp.float32)
    for i, (w, b) in enumerate(params):
        if i > 0:
            h = _apply_activation(activation, h)
        h = jnp.dot(h.astype(jnp.bfloat16), w.astype(jnp.bfloat16),
                    preferred_element_type=jnp.float32) + b.reshape(1, -1)
    return _apply_activation(output_activation, h)


if __name__ == "__main__":
    # Config consistent with the module's forward:
    #   MLP(input_size=16, output_size=8, hidden=[32, 32], activation=...,
    #       output_activation=...)
    input_size, output_size = 16, 8
    hidden = [32, 32]
    batch = 8

    key = jax.random.PRNGKey(0)
    key, kx = jax.random.split(key)
    x = jax.random.normal(kx, (batch, input_size), jnp.float32)
    params = init_mlp_params(key, input_size, hidden, output_size)

    # Exercise both the plain path and the softmax (padded-lane-masked) path.
    for act, out_act in [("relu", None), ("tanh", "softmax")]:
        fwd = jax.jit(functools.partial(mlp_forward, activation=act,
                                        output_activation=out_act))
        out = fwd(x, params)
        jax.block_until_ready(out)

        ref = mlp_reference(x, params, act, out_act)
        assert out.shape == (batch, output_size)
        assert jnp.allclose(out, ref, atol=1e-4, rtol=1e-4), (
            "mismatch vs reference for activation={}, output_activation={}"
            .format(act, out_act))

    print("KERNEL_OK")
</pallas_src>

<mosaic_0001>
module attributes {stable_mosaic.version = 11 : i64} {
  func.func @kernel(%arg0: i32, %arg1: memref<8x128xbf16, #tpu.memory_space<vmem>>, %arg2: memref<128x128xbf16, #tpu.memory_space<vmem>>, %arg3: memref<1x128xf32, #tpu.memory_space<vmem>>, %arg4: memref<128x128xbf16, #tpu.memory_space<vmem>>, %arg5: memref<1x128xf32, #tpu.memory_space<vmem>>, %arg6: memref<128x128xbf16, #tpu.memory_space<vmem>>, %arg7: memref<1x128xf32, #tpu.memory_space<vmem>>, %arg8: memref<8x128xf32, #tpu.memory_space<vmem>>) attributes {dimension_semantics = [#tpu.dimension_semantics<parallel>], iteration_bounds = array<i64: 1>, scalar_prefetch = 0 : i64, scratch_operands = 0 : i64, tpu.core_type = #tpu.core_type<tc>, window_params = [{transform_indices = @transform_0, window_bounds = array<i64: 8, 128>}, {pipeline_mode = #tpu.pipeline_mode<synchronous>, transform_indices = @transform_1, window_bounds = array<i64: 128, 128>}, {pipeline_mode = #tpu.pipeline_mode<synchronous>, transform_indices = @transform_2, window_bounds = array<i64: 1, 128>}, {pipeline_mode = #tpu.pipeline_mode<synchronous>, transform_indices = @transform_3, window_bounds = array<i64: 128, 128>}, {pipeline_mode = #tpu.pipeline_mode<synchronous>, transform_indices = @transform_4, window_bounds = array<i64: 1, 128>}, {pipeline_mode = #tpu.pipeline_mode<synchronous>, transform_indices = @transform_5, window_bounds = array<i64: 128, 128>}, {pipeline_mode = #tpu.pipeline_mode<synchronous>, transform_indices = @transform_6, window_bounds = array<i64: 1, 128>}, {transform_indices = @transform_7, window_bounds = array<i64: 8, 128>}]} {
    %c0 = arith.constant 0 : index
    %c0_0 = arith.constant 0 : index
    %0 = vector.load %arg1[%c0, %c0_0] : memref<8x128xbf16, #tpu.memory_space<vmem>>, vector<8x128xbf16>
    %1 = arith.extf %0 : vector<8x128xbf16> to vector<8x128xf32>
    %c0_1 = arith.constant 0 : index
    %c0_2 = arith.constant 0 : index
    %2 = vector.load %arg2[%c0_1, %c0_2] : memref<128x128xbf16, #tpu.memory_space<vmem>>, vector<128x128xbf16>
    %c0_3 = arith.constant 0 : index
    %c0_4 = arith.constant 0 : index
    %3 = vector.load %arg3[%c0_3, %c0_4] : memref<1x128xf32, #tpu.memory_space<vmem>>, vector<1x128xf32>
    %4 = arith.truncf %1 : vector<8x128xf32> to vector<8x128xbf16>
    %cst = arith.constant dense<0.000000e+00> : vector<8x128xf32>
    %5 = tpu.matmul %4, %2, %cst {dimension_numbers = #tpu.dot_dimension_numbers<[1], [0], [0], [1], [0, 0, 1, 1], [], []>} : vector<8x128xbf16>, vector<128x128xbf16>, vector<8x128xf32> -> vector<8x128xf32>
    %6 = vector.broadcast %3 : vector<1x128xf32> to vector<8x128xf32>
    %7 = arith.addf %5, %6 : vector<8x128xf32>
    %cst_5 = arith.constant 0.000000e+00 : f32
    %8 = vector.broadcast %cst_5 : f32 to vector<8x128xf32>
    %9 = arith.maximumf %7, %8 : vector<8x128xf32>
    %c0_6 = arith.constant 0 : index
    %c0_7 = arith.constant 0 : index
    %10 = vector.load %arg4[%c0_6, %c0_7] : memref<128x128xbf16, #tpu.memory_space<vmem>>, vector<128x128xbf16>
    %c0_8 = arith.constant 0 : index
    %c0_9 = arith.constant 0 : index
    %11 = vector.load %arg5[%c0_8, %c0_9] : memref<1x128xf32, #tpu.memory_space<vmem>>, vector<1x128xf32>
    %12 = arith.truncf %9 : vector<8x128xf32> to vector<8x128xbf16>
    %cst_10 = arith.constant dense<0.000000e+00> : vector<8x128xf32>
    %13 = tpu.matmul %12, %10, %cst_10 {dimension_numbers = #tpu.dot_dimension_numbers<[1], [0], [0], [1], [0, 0, 1, 1], [], []>} : vector<8x128xbf16>, vector<128x128xbf16>, vector<8x128xf32> -> vector<8x128xf32>
    %14 = vector.broadcast %11 : vector<1x128xf32> to vector<8x128xf32>
    %15 = arith.addf %13, %14 : vector<8x128xf32>
    %cst_11 = arith.constant 0.000000e+00 : f32
    %16 = vector.broadcast %cst_11 : f32 to vector<8x128xf32>
    %17 = arith.maximumf %15, %16 : vector<8x128xf32>
    %c0_12 = arith.constant 0 : index
    %c0_13 = arith.constant 0 : index
    %18 = vector.load %arg6[%c0_12, %c0_13] : memref<128x128xbf16, #tpu.memory_space<vmem>>, vector<128x128xbf16>
    %c0_14 = arith.constant 0 : index
    %c0_15 = arith.constant 0 : index
    %19 = vector.load %arg7[%c0_14, %c0_15] : memref<1x128xf32, #tpu.memory_space<vmem>>, vector<1x128xf32>
    %20 = arith.truncf %17 : vector<8x128xf32> to vector<8x128xbf16>
    %cst_16 = arith.constant dense<0.000000e+00> : vector<8x128xf32>
    %21 = tpu.matmul %20, %18, %cst_16 {dimension_numbers = #tpu.dot_dimension_numbers<[1], [0], [0], [1], [0, 0, 1, 1], [], []>} : vector<8x128xbf16>, vector<128x128xbf16>, vector<8x128xf32> -> vector<8x128xf32>
    %22 = vector.broadcast %19 : vector<1x128xf32> to vector<8x128xf32>
    %23 = arith.addf %21, %22 : vector<8x128xf32>
    %c0_17 = arith.constant 0 : index
    %c0_18 = arith.constant 0 : index
    %24 = vector.load %arg8[%c0_17, %c0_18] : memref<8x128xf32, #tpu.memory_space<vmem>>, vector<8x128xf32>
    tpu.vector_store %arg8[%c0_17, %c0_18], %23 {strides = array<i32>} : memref<8x128xf32, #tpu.memory_space<vmem>>, vector<8x128xf32>,
    return
  }
  func.func @transform_0(%arg0: i32) -> (i32, i32) {
    %c0_i32 = arith.constant 0 : i32
    %c0_i32_0 = arith.constant 0 : i32
    return %arg0, %c0_i32 : i32, i32
  }
  func.func @transform_1(%arg0: i32) -> (i32, i32) {
    %c0_i32 = arith.constant 0 : i32
    %c0_i32_0 = arith.constant 0 : i32
    %c0_i32_1 = arith.constant 0 : i32
    return %c0_i32, %c0_i32_0 : i32, i32
  }
  func.func @transform_2(%arg0: i32) -> (i32, i32) {
    %c0_i32 = arith.constant 0 : i32
    %c0_i32_0 = arith.constant 0 : i32
    %c0_i32_1 = arith.constant 0 : i32
    return %c0_i32, %c0_i32_0 : i32, i32
  }
  func.func @transform_3(%arg0: i32) -> (i32, i32) {
    %c0_i32 = arith.constant 0 : i32
    %c0_i32_0 = arith.constant 0 : i32
    %c0_i32_1 = arith.constant 0 : i32
    return %c0_i32, %c0_i32_0 : i32, i32
  }
  func.func @transform_4(%arg0: i32) -> (i32, i32) {
    %c0_i32 = arith.constant 0 : i32
    %c0_i32_0 = arith.constant 0 : i32
    %c0_i32_1 = arith.constant 0 : i32
    return %c0_i32, %c0_i32_0 : i32, i32
  }
  func.func @transform_5(%arg0: i32) -> (i32, i32) {
    %c0_i32 = arith.constant 0 : i32
    %c0_i32_0 = arith.constant 0 : i32
    %c0_i32_1 = arith.constant 0 : i32
    return %c0_i32, %c0_i32_0 : i32, i32
  }
  func.func @transform_6(%arg0: i32) -> (i32, i32) {
    %c0_i32 = arith.constant 0 : i32
    %c0_i32_0 = arith.constant 0 : i32
    %c0_i32_1 = arith.constant 0 : i32
    return %c0_i32, %c0_i32_0 : i32, i32
  }
  func.func @transform_7(%arg0: i32) -> (i32, i32) {
    %c0_i32 = arith.constant 0 : i32
    %c0_i32_0 = arith.constant 0 : i32
    return %arg0, %c0_i32 : i32, i32
  }
}

</mosaic_0001>

<llo_original>
// kernel: mlp_forward.1
$region0: #{mlp_forward.1}
  #allocation0 [shape = 'u32[]', space=smem, size = 0x4, offset = 0x4, fixed_abs, tag = 'smem constant byte address 0x4 - core index']
  #allocation1 [shape = 'u32[144,128]{1,0:T(1,128)}', space=vmem, size = 0x12000, scoped, tag = 'internal scratch']
  %s0 = inlined_call_operand.vmem [shape: bf16[8,128], index: 0, kind: input, shape index: {}]
  %s1 = inlined_call_operand.vmem [shape: bf16[128,128], index: 1, kind: input, shape index: {}]
  %s2 = inlined_call_operand.vmem [shape: f32[1,128], index: 2, kind: input, shape index: {}]
  %s3 = inlined_call_operand.vmem [shape: bf16[128,128], index: 3, kind: input, shape index: {}]
  %s4 = inlined_call_operand.vmem [shape: f32[1,128], index: 4, kind: input, shape index: {}]
  %s5 = inlined_call_operand.vmem [shape: bf16[128,128], index: 5, kind: input, shape index: {}]
  %s6 = inlined_call_operand.vmem [shape: f32[1,128], index: 6, kind: input, shape index: {}]
  %s7 = inlined_call_operand.hbm [shape: f32[8,128], index: 7, kind: output, shape index: {}]
  %s8 = sld [smem:[#allocation0]]
  $region38: #{mlp_forward.1} parent=0
    _
  %s10 = ssub.s32 1, %s8
  %s11 = scalar_select 0, %s10, %s8
  $region1: #{mlp_forward.1} parent=0
    #allocation2 [shape = 'u8[4096]{0}', space=vmem, size = 0x1000, scoped, tag = 'output window, operand 0, single buffered']
    #allocation3 [shape = 's32[1]{0}', space=sflag, size = 0x4, scoped, tag = 'scoped memory for mlp_forward.1']
    %12 = vsyncpa [#allocation3], 0
    // Predicated region
    $region2: #{mlp_forward.1} parent=1 // pred_check
      _
    $region3: #{mlp_forward.1} parent=1 // pred_check_branch
      %14 = sbr.rel (0) target = $region5
    $region4: #{mlp_forward.1} parent=1 // pred_region
      _
    $region5: #{mlp_forward.1} parent=1 // pred_fallthru
      _
    // Predicated region
    $region6: #{mlp_forward.1} parent=1 // pred_check
      _
    $region7: #{mlp_forward.1} parent=1 // pred_check_branch
      %16 = sbr.rel (0) target = $region9
    $region8: #{mlp_forward.1} parent=1 // pred_region
      _
    $region9: #{mlp_forward.1} parent=1 // pred_fallthru
      _
    // Predicated region
    $region10: #{mlp_forward.1} parent=1 // pred_check
      _
    $region11: #{mlp_forward.1} parent=1 // pred_check_branch
      %18 = sbr.rel (0) target = $region13
    $region12: #{mlp_forward.1} parent=1 // pred_region
      _
    $region13: #{mlp_forward.1} parent=1 // pred_fallthru
      _
    // Predicated region
    $region14: #{mlp_forward.1} parent=1 // pred_check
      _
    $region15: #{mlp_forward.1} parent=1 // pred_check_branch
      %20 = sbr.rel (0) target = $region17
    $region16: #{mlp_forward.1} parent=1 // pred_region
      _
    $region17: #{mlp_forward.1} parent=1 // pred_fallthru
      _
    // Predicated region
    $region18: #{mlp_forward.1} parent=1 // pred_check
      _
    $region19: #{mlp_forward.1} parent=1 // pred_check_branch
      %22 = sbr.rel (0) target = $region21
    $region20: #{mlp_forward.1} parent=1 // pred_region
      _
    $region21: #{mlp_forward.1} parent=1 // pred_fallthru
      _
    // Predicated region
    $region22: #{mlp_forward.1} parent=1 // pred_check
      _
    $region23: #{mlp_forward.1} parent=1 // pred_check_branch
      %24 = sbr.rel (0) target = $region25
    $region24: #{mlp_forward.1} parent=1 // pred_region
      _
    $region25: #{mlp_forward.1} parent=1 // pred_fallthru
      _
    // Predicated region
    $region26: #{mlp_forward.1} parent=1 // pred_check
      _
    $region27: #{mlp_forward.1} parent=1 // pred_check_branch
      %26 = sbr.rel (0) target = $region29
    $region28: #{mlp_forward.1} parent=1 // pred_region
      _
    $region29: #{mlp_forward.1} parent=1 // pred_fallthru
      _
    %v28 = vld [vmem:[%s0] sm:$0xf]
    %v29 = vld [vmem:[%s1] sm:$0xf]
    %v30 = vld [vmem:[%s1 + $0x4] sm:$0xf]
    %v31 = vld [vmem:[%s1 + $0x8] sm:$0xf]
    %v32 = vld [vmem:[%s1 + $0xc] sm:$0xf]
    %v33 = vld [vmem:[%s1 + $0x10] sm:$0xf]
    %v34 = vld [vmem:[%s1 + $0x14] sm:$0xf]
    %v35 = vld [vmem:[%s1 + $0x18] sm:$0xf]
    %v36 = vld [vmem:[%s1 + $0x1c] sm:$0xf]
    %v37 = vld [vmem:[%s1 + $0x20] sm:$0xf]
    %v38 = vld [vmem:[%s1 + $0x24] sm:$0xf]
    %v39 = vld [vmem:[%s1 + $0x28] sm:$0xf]
    %v40 = vld [vmem:[%s1 + $0x2c] sm:$0xf]
    %v41 = vld [vmem:[%s1 + $0x30] sm:$0xf]
    %v42 = vld [vmem:[%s1 + $0x34] sm:$0xf]
    %v43 = vld [vmem:[%s1 + $0x38] sm:$0xf]
    %v44 = vld [vmem:[%s1 + $0x3c] sm:$0xf]
    %v45 = vld [vmem:[%s2] sm:$0x1]
    %v47 = vlaneseq
    %v48 = vshrl.u32 %v47, 7
    %v49 = vsub.s32 0, %v48
    %v50 = vrot.slane %v45, %v49
    %v68 = vunpack.c.l.b16 %v29
    %v69 = vunpack.c.l.b16 %v30
    %v70 = vunpack.c.l.b16 %v31
    %v71 = vunpack.c.l.b16 %v32
    %v72 = vunpack.c.l.b16 %v33
    %v73 = vunpack.c.l.b16 %v34
    %v74 = vunpack.c.l.b16 %v35
    %v75 = vunpack.c.l.b16 %v36
    %v76 = vunpack.c.l.b16 %v37
    %v77 = vunpack.c.l.b16 %v38
    %v78 = vunpack.c.l.b16 %v39
    %v79 = vunpack.c.l.b16 %v40
    %v80 = vunpack.c.l.b16 %v41
    %v81 = vunpack.c.l.b16 %v42
    %v82 = vunpack.c.l.b16 %v43
    %v83 = vunpack.c.l.b16 %v44
    %v84 = vpack.c.b16 %v69, %v68
    %v85 = vpack.c.b16 %v71, %v70
    %v86 = vpack.c.b16 %v73, %v72
    %v87 = vpack.c.b16 %v75, %v74
    %v88 = vpack.c.b16 %v77, %v76
    %v89 = vpack.c.b16 %v79, %v78
    %v90 = vpack.c.b16 %v81, %v80
    %v91 = vpack.c.b16 %v83, %v82
    %100 = vmatprep.subr.bf16.mxu0 0
    %101 = vmatpush1.bf16.msra.mxu0 %v84
    %102 = vmatprep.subr.bf16.mxu0 0
    %103 = vmatpush1.bf16.msra.mxu0 %v85
    %104 = vmatprep.subr.bf16.mxu0 0
    %105 = vmatpush1.bf16.msra.mxu0 %v86
    %106 = vmatprep.subr.bf16.mxu0 0
    %107 = vmatpush1.bf16.msra.mxu0 %v87
    %108 = vmatprep.subr.bf16.mxu0 0
    %109 = vmatpush1.bf16.msra.mxu0 %v88
    %110 = vmatprep.subr.bf16.mxu0 0
    %111 = vmatpush1.bf16.msra.mxu0 %v89
    %112 = vmatprep.subr.bf16.mxu0 0
    %113 = vmatpush1.bf16.msra.mxu0 %v90
    %114 = vmatprep.subr.bf16.mxu0 0
    %115 = vmatpush1.bf16.msra.mxu0 %v91
    %116 = vmatprep.subr.bf16.mxu0 0
    %117 = vmatpush1.bf16.msra.mxu0 0
    %118 = vmatprep.subr.bf16.mxu0 0
    %119 = vmatpush1.bf16.msra.mxu0 0
    %120 = vmatprep.subr.bf16.mxu0 0
    %121 = vmatpush1.bf16.msra.mxu0 0
    %122 = vmatprep.subr.bf16.mxu0 0
    %123 = vmatpush1.bf16.msra.mxu0 0
    %124 = vmatprep.subr.bf16.mxu0 0
    %125 = vmatpush1.bf16.msra.mxu0 0
    %126 = vmatprep.subr.bf16.mxu0 0
    %127 = vmatpush1.bf16.msra.mxu0 0
    %128 = vmatprep.subr.bf16.mxu0 0
    %129 = vmatpush1.bf16.msra.mxu0 0
    %130 = vmatprep.subr.bf16.mxu0 0
    %131 = vmatpush1.bf16.msra.mxu0 0
    %132 = vmatprep.mubr.bf16.mxu0 0
    %133 = vmatmul.mubr.bf16.gmra.mrb[0].mxu0 %v28
    %v134 = vpop.f32.mrb[0].mxu0
    %v135 = vadd.f32 %v50, %v134
    %v136 = vpop.f32.mrb[0].mxu0
    %v137 = vpop.f32.mrb[0].mxu0
    %v138 = vpop.f32.mrb[0].mxu0
    %139 = vdwg.mxu0
    %v140 = vmax.f32 %v135, 0.0
    %v141 = vld [vmem:[%s3] sm:$0xf]
    %v142 = vld [vmem:[%s3 + $0x4] sm:$0xf]
    %v143 = vld [vmem:[%s3 + $0x8] sm:$0xf]
    %v144 = vld [vmem:[%s3 + $0xc] sm:$0xf]
    %v145 = vld [vmem:[%s3 + $0x10] sm:$0xf]
    %v146 = vld [vmem:[%s3 + $0x14] sm:$0xf]
    %v147 = vld [vmem:[%s3 + $0x18] sm:$0xf]
    %v148 = vld [vmem:[%s3 + $0x1c] sm:$0xf]
    %v149 = vld [vmem:[%s3 + $0x20] sm:$0xf]
    %v150 = vld [vmem:[%s3 + $0x24] sm:$0xf]
    %v151 = vld [vmem:[%s3 + $0x28] sm:$0xf]
    %v152 = vld [vmem:[%s3 + $0x2c] sm:$0xf]
    %v153 = vld [vmem:[%s3 + $0x30] sm:$0xf]
    %v154 = vld [vmem:[%s3 + $0x34] sm:$0xf]
    %v155 = vld [vmem:[%s3 + $0x38] sm:$0xf]
    %v156 = vld [vmem:[%s3 + $0x3c] sm:$0xf]
    %v157 = vld [vmem:[%s4] sm:$0x1]
    %v158 = vpack.c.bf16 %v140, %v140
    %v160 = vlaneseq
    %v161 = vshrl.u32 %v160, 7
    %v162 = vsub.s32 0, %v161
    %v163 = vrot.slane %v157, %v162
    %v181 = vunpack.c.l.b16 %v141
    %v182 = vunpack.c.l.b16 %v142
    %v183 = vunpack.c.l.b16 %v143
    %v184 = vunpack.c.l.b16 %v144
    %v185 = vunpack.c.l.b16 %v145
    %v186 = vunpack.c.l.b16 %v146
    %v187 = vunpack.c.l.b16 %v147
    %v188 = vunpack.c.l.b16 %v148
    %v189 = vunpack.c.l.b16 %v149
    %v190 = vunpack.c.l.b16 %v150
    %v191 = vunpack.c.l.b16 %v151
    %v192 = vunpack.c.l.b16 %v152
    %v193 = vunpack.c.l.b16 %v153
    %v194 = vunpack.c.l.b16 %v154
    %v195 = vunpack.c.l.b16 %v155
    %v196 = vunpack.c.l.b16 %v156
    %v197 = vpack.c.b16 %v182, %v181
    %v198 = vpack.c.b16 %v184, %v183
    %v199 = vpack.c.b16 %v186, %v185
    %v200 = vpack.c.b16 %v188, %v187
    %v201 = vpack.c.b16 %v190, %v189
    %v202 = vpack.c.b16 %v192, %v191
    %v203 = vpack.c.b16 %v194, %v193
    %v204 = vpack.c.b16 %v196, %v195
    %213 = vmatprep.subr.bf16.mxu0 0
    %214 = vmatpush1.bf16.msra.mxu0 %v197
    %215 = vmatprep.subr.bf16.mxu0 0
    %216 = vmatpush1.bf16.msra.mxu0 %v198
    %217 = vmatprep.subr.bf16.mxu0 0
    %218 = vmatpush1.bf16.msra.mxu0 %v199
    %219 = vmatprep.subr.bf16.mxu0 0
    %220 = vmatpush1.bf16.msra.mxu0 %v200
    %221 = vmatprep.subr.bf16.mxu0 0
    %222 = vmatpush1.bf16.msra.mxu0 %v201
    %223 = vmatprep.subr.bf16.mxu0 0
    %224 = vmatpush1.bf16.msra.mxu0 %v202
    %225 = vmatprep.subr.bf16.mxu0 0
    %226 = vmatpush1.bf16.msra.mxu0 %v203
    %227 = vmatprep.subr.bf16.mxu0 0
    %228 = vmatpush1.bf16.msra.mxu0 %v204
    %229 = vmatprep.subr.bf16.mxu0 0
    %230 = vmatpush1.bf16.msra.mxu0 0
    %231 = vmatprep.subr.bf16.mxu0 0
    %232 = vmatpush1.bf16.msra.mxu0 0
    %233 = vmatprep.subr.bf16.mxu0 0
    %234 = vmatpush1.bf16.msra.mxu0 0
    %235 = vmatprep.subr.bf16.mxu0 0
    %236 = vmatpush1.bf16.msra.mxu0 0
    %237 = vmatprep.subr.bf16.mxu0 0
    %238 = vmatpush1.bf16.msra.mxu0 0
    %239 = vmatprep.subr.bf16.mxu0 0
    %240 = vmatpush1.bf16.msra.mxu0 0
    %241 = vmatprep.subr.bf16.mxu0 0
    %242 = vmatpush1.bf16.msra.mxu0 0
    %243 = vmatprep.subr.bf16.mxu0 0
    %244 = vmatpush1.bf16.msra.mxu0 0
    %245 = vmatprep.mubr.bf16.mxu0 0
    %246 = vmatmul.mubr.bf16.gmra.mrb[0].mxu0 %v158
    %v247 = vpop.f32.mrb[0].mxu0
    %v248 = vadd.f32 %v163, %v247
    %v249 = vpop.f32.mrb[0].mxu0
    %v250 = vpop.f32.mrb[0].mxu0
    %v251 = vpop.f32.mrb[0].mxu0
    %252 = vdwg.mxu0
    %v253 = vmax.f32 %v248, 0.0
    %v254 = vld [vmem:[%s5] sm:$0xf]
    %v255 = vld [vmem:[%s5 + $0x4] sm:$0xf]
    %v256 = vld [vmem:[%s5 + $0x8] sm:$0xf]
    %v257 = vld [vmem:[%s5 + $0xc] sm:$0xf]
    %v258 = vld [vmem:[%s5 + $0x10] sm:$0xf]
    %v259 = vld [vmem:[%s5 + $0x14] sm:$0xf]
    %v260 = vld [vmem:[%s5 + $0x18] sm:$0xf]
    %v261 = vld [vmem:[%s5 + $0x1c] sm:$0xf]
    %v262 = vld [vmem:[%s5 + $0x20] sm:$0xf]
    %v263 = vld [vmem:[%s5 + $0x24] sm:$0xf]
    %v264 = vld [vmem:[%s5 + $0x28] sm:$0xf]
    %v265 = vld [vmem:[%s5 + $0x2c] sm:$0xf]
    %v266 = vld [vmem:[%s5 + $0x30] sm:$0xf]
    %v267 = vld [vmem:[%s5 + $0x34] sm:$0xf]
    %v268 = vld [vmem:[%s5 + $0x38] sm:$0xf]
    %v269 = vld [vmem:[%s5 + $0x3c] sm:$0xf]
    %v270 = vld [vmem:[%s6] sm:$0x1]
    %v271 = vpack.c.bf16 %v253, %v253
    %v273 = vlaneseq
    %v274 = vshrl.u32 %v273, 7
    %v275 = vsub.s32 0, %v274
    %v276 = vrot.slane %v270, %v275
    %v294 = vunpack.c.l.b16 %v254
    %v295 = vunpack.c.l.b16 %v255
    %v296 = vunpack.c.l.b16 %v256
    %v297 = vunpack.c.l.b16 %v257
    %v298 = vunpack.c.l.b16 %v258
    %v299 = vunpack.c.l.b16 %v259
    %v300 = vunpack.c.l.b16 %v260
    %v301 = vunpack.c.l.b16 %v261
    %v302 = vunpack.c.l.b16 %v262
    %v303 = vunpack.c.l.b16 %v263
    %v304 = vunpack.c.l.b16 %v264
    %v305 = vunpack.c.l.b16 %v265
    %v306 = vunpack.c.l.b16 %v266
    %v307 = vunpack.c.l.b16 %v267
    %v308 = vunpack.c.l.b16 %v268
    %v309 = vunpack.c.l.b16 %v269
    %v310 = vpack.c.b16 %v295, %v294
    %v311 = vpack.c.b16 %v297, %v296
    %v312 = vpack.c.b16 %v299, %v298
    %v313 = vpack.c.b16 %v301, %v300
    %v314 = vpack.c.b16 %v303, %v302
    %v315 = vpack.c.b16 %v305, %v304
    %v316 = vpack.c.b16 %v307, %v306
    %v317 = vpack.c.b16 %v309, %v308
    %326 = vmatprep.subr.bf16.mxu0 0
    %327 = vmatpush1.bf16.msra.mxu0 %v310
    %328 = vmatprep.subr.bf16.mxu0 0
    %329 = vmatpush1.bf16.msra.mxu0 %v311
    %330 = vmatprep.subr.bf16.mxu0 0
    %331 = vmatpush1.bf16.msra.mxu0 %v312
    %332 = vmatprep.subr.bf16.mxu0 0
    %333 = vmatpush1.bf16.msra.mxu0 %v313
    %334 = vmatprep.subr.bf16.mxu0 0
    %335 = vmatpush1.bf16.msra.mxu0 %v314
    %336 = vmatprep.subr.bf16.mxu0 0
    %337 = vmatpush1.bf16.msra.mxu0 %v315
    %338 = vmatprep.subr.bf16.mxu0 0
    %339 = vmatpush1.bf16.msra.mxu0 %v316
    %340 = vmatprep.subr.bf16.mxu0 0
    %341 = vmatpush1.bf16.msra.mxu0 %v317
    %342 = vmatprep.subr.bf16.mxu0 0
    %343 = vmatpush1.bf16.msra.mxu0 0
    %344 = vmatprep.subr.bf16.mxu0 0
    %345 = vmatpush1.bf16.msra.mxu0 0
    %346 = vmatprep.subr.bf16.mxu0 0
    %347 = vmatpush1.bf16.msra.mxu0 0
    %348 = vmatprep.subr.bf16.mxu0 0
    %349 = vmatpush1.bf16.msra.mxu0 0
    %350 = vmatprep.subr.bf16.mxu0 0
    %351 = vmatpush1.bf16.msra.mxu0 0
    %352 = vmatprep.subr.bf16.mxu0 0
    %353 = vmatpush1.bf16.msra.mxu0 0
    %354 = vmatprep.subr.bf16.mxu0 0
    %355 = vmatpush1.bf16.msra.mxu0 0
    %356 = vmatprep.subr.bf16.mxu0 0
    %357 = vmatpush1.bf16.msra.mxu0 0
    %358 = vmatprep.mubr.bf16.mxu0 0
    %359 = vmatmul.mubr.bf16.gmra.mrb[0].mxu0 %v271
    %v360 = vpop.f32.mrb[0].mxu0
    %v361 = vadd.f32 %v276, %v360
    %v362 = vpop.f32.mrb[0].mxu0
    %v363 = vpop.f32.mrb[0].mxu0
    %v364 = vpop.f32.mrb[0].mxu0
    %365 = vdwg.mxu0
    %366 = vst [vmem:[#allocation2] sm:$0xff] %v361
    // Predicated region
    $region30: #{mlp_forward.1} parent=1 // pred_check
      _
    $region31: #{mlp_forward.1} parent=1 // pred_check_branch
      %368 = sbr.rel (0) target = $region33
    $region32: #{mlp_forward.1} parent=1 // pred_region
      %s370 = ssub.s32 128, 128
      %371 = vsyncadd [#allocation3], %s370
      %s373 = sshll.u32 [#allocation2], 4
      %s374 = int_to_ptr.vmem [resolvable:$true] %s373
      %376 = dma.vmem_to_hbm [thread:$0]  %s374, 128, %s7, [#allocation3]
    $region33: #{mlp_forward.1} parent=1 // pred_fallthru
      _
    // Predicated region
    $region34: #{mlp_forward.1} parent=1 // pred_check
      _
    $region35: #{mlp_forward.1} parent=1 // pred_check_branch
      %378 = sbr.rel (0) target = $region37
    $region36: #{mlp_forward.1} parent=1 // pred_region
      %379 = dma.done [#allocation3], 128
    $region37: #{mlp_forward.1} parent=1 // pred_fallthru
      _
    %380 = vsyncpa [#allocation3], 1

</llo_original>
